<compile_context>
chip_gen: v5e
topology: v5e:2x2
jax: 0.10.0
libtpu: 0.0.40
codegen_flags: <defaults>
</compile_context>

<pallas_src>
import functools
import math

import jax
import jax.numpy as jnp
from jax.experimental import pallas as pl
from jax.experimental.pallas import tpu as pltpu

_VMEM_LIMIT = 64 * 1024 * 1024  # fits v7x physical VMEM; >= scoped default on v5e/v6e


def _pick_tile(dim, preferred, align):
    """Largest aligned tile <= preferred that divides dim, else the full dim."""
    if dim <= preferred:
        return dim
    t = (preferred // align) * align
    while t >= align:
        if dim % t == 0:
            return t
        t -= align
    return dim  # TODO(synk): ragged dims (e.g. vocab=50257) fall back to a full-dim block.


def _cparams(semantics):
    return pltpu.CompilerParams(dimension_semantics=semantics,
                                vmem_limit_bytes=_VMEM_LIMIT)


# ----------------------------- Pallas kernels -----------------------------


def _ln_matmul_kernel(x_ref, g_ref, beta_ref, w_ref, *rest, activation, has_bias):
    if has_bias:
        bias_ref, o_ref, lnx_ref = rest
    else:
        bias_ref = None
        o_ref, lnx_ref = rest
    j = pl.program_id(1)

    # LayerNorm of this row tile computed once (f32) and cached in bf16 scratch.
    @pl.when(j == 0)
    def _():
        x = x_ref[...].astype(jnp.float32)
        mean = jnp.mean(x, axis=-1, keepdims=True)
        var = jnp.mean(jnp.square(x - mean), axis=-1, keepdims=True)
        y = (x - mean) * jax.lax.rsqrt(var + 1e-5)          # torch LayerNorm eps
        y = y * g_ref[...].astype(jnp.float32) + beta_ref[...].astype(jnp.float32)
        lnx_ref[...] = y.astype(lnx_ref.dtype)

    acc = jnp.dot(lnx_ref[...], w_ref[...], preferred_element_type=jnp.float32)
    if has_bias:
        acc = acc + bias_ref[...].astype(jnp.float32)
    if activation == "gelu":
        # GPT-2 "new GELU" (tanh approximation), computed in f32.
        acc = 0.5 * acc * (1.0 + jnp.tanh(0.7978845608028654 *
                                          (acc + 0.044715 * acc * acc * acc)))
    o_ref[...] = acc.astype(o_ref.dtype)


def _matmul_resid_kernel(a_ref, w_ref, bias_ref, res_ref, o_ref, acc_ref):
    k = pl.program_id(2)

    @pl.when(k == 0)
    def _():
        acc_ref[...] = jnp.zeros(acc_ref.shape, acc_ref.dtype)

    acc_ref[...] += jnp.dot(a_ref[...], w_ref[...], preferred_element_type=jnp.float32)

    @pl.when(k == pl.num_programs(2) - 1)
    def _():
        y = (acc_ref[...] + bias_ref[...].astype(jnp.float32)
             + res_ref[...].astype(jnp.float32))            # fused residual add
        o_ref[...] = y.astype(o_ref.dtype)


def _flash_attn_kernel(qr_ref, kvr_ref, o_ref, m_sc, l_sc, acc_sc,
                       *, n_head, head_dim, scale):
    qi = pl.program_id(1)
    ki = pl.program_id(2)
    tq = qr_ref.shape[1]
    tk = kvr_ref.shape[1]
    C = n_head * head_dim

    @pl.when(ki == 0)
    def _():
        m_sc[...] = jnp.full(m_sc.shape, -jnp.inf, m_sc.dtype)
        l_sc[...] = jnp.zeros(l_sc.shape, l_sc.dtype)
        acc_sc[...] = jnp.zeros(acc_sc.shape, acc_sc.dtype)

    # Skip kv blocks fully above the causal diagonal (requires tq == tk).
    @pl.when(ki <= qi)
    def _():
        rows = qi * tq + jax.lax.broadcasted_iota(jnp.int32, (tq, tk), 0)
        cols = ki * tk + jax.lax.broadcasted_iota(jnp.int32, (tq, tk), 1)
        causal = cols <= rows
        for h in range(n_head):                              # static unroll
            q = qr_ref[0, :, h * head_dim:(h + 1) * head_dim]
            k = kvr_ref[0, :, C + h * head_dim:C + (h + 1) * head_dim]
            v = kvr_ref[0, :, 2 * C + h * head_dim:2 * C + (h + 1) * head_dim]
            s = jax.lax.dot_general(q, k, (((1,), (1,)), ((), ())),
                                    preferred_element_type=jnp.float32) * scale
            s = jnp.where(causal, s, -1e30)                  # mask stays in f32
            m_prev = m_sc[h]                                 # (tq, 1)
            m_new = jnp.maximum(m_prev, jnp.max(s, axis=-1, keepdims=True))
            alpha = jnp.exp(m_prev - m_new)
            p = jnp.exp(s - m_new)
            l_sc[h] = alpha * l_sc[h] + jnp.sum(p, axis=-1, keepdims=True)
            pv = jnp.dot(p.astype(v.dtype), v, preferred_element_type=jnp.float32)
            hs = slice(h * head_dim, (h + 1) * head_dim)
            acc_sc[:, hs] = alpha * acc_sc[:, hs] + pv
            m_sc[h] = m_new

    @pl.when(ki == pl.num_programs(2) - 1)
    def _():
        for h in range(n_head):
            inv = pl.reciprocal(l_sc[h], approx=True)        # EUP, frees the VPU
            hs = slice(h * head_dim, (h + 1) * head_dim)
            acc_sc[:, hs] = acc_sc[:, hs] * inv
        o_ref[0] = acc_sc[...].astype(o_ref.dtype)           # single lane-dense store


# ----------------------------- Pallas wrappers -----------------------------


def ln_matmul(x2d, gamma, beta, w, bias=None, activation="none",
              out_dtype=jnp.bfloat16):
    M, K = x2d.shape
    _, N = w.shape
    tm = _pick_tile(M, 256, 8)
    tn = _pick_tile(N, 512, 128)
    grid = (M // tm, N // tn)
    in_specs = [
        pl.BlockSpec((tm, K), lambda i, j: (i, 0)),
        pl.BlockSpec((1, K), lambda i, j: (0, 0)),
        pl.BlockSpec((1, K), lambda i, j: (0, 0)),
        pl.BlockSpec((K, tn), lambda i, j: (0, j)),
    ]
    args = [x2d, gamma.reshape(1, K), beta.reshape(1, K), w]
    if bias is not None:
        in_specs.append(pl.BlockSpec((1, tn), lambda i, j: (0, j)))
        args.append(bias.reshape(1, N))
    return pl.pallas_call(
        functools.partial(_ln_matmul_kernel, activation=activation,
                          has_bias=bias is not None),
        out_shape=jax.ShapeDtypeStruct((M, N), out_dtype),
        grid=grid,
        in_specs=in_specs,
        out_specs=pl.BlockSpec((tm, tn), lambda i, j: (i, j)),
        scratch_shapes=[pltpu.VMEM((tm, K), jnp.bfloat16)],
        compiler_params=_cparams(("parallel", "arbitrary")),
    )(*args)


def matmul_bias_residual(a2d, w, bias, res2d, out_dtype=jnp.bfloat16):
    M, K = a2d.shape
    _, N = w.shape
    tm = _pick_tile(M, 256, 8)
    tn = _pick_tile(N, 256, 128)
    tk = _pick_tile(K, 512, 128)
    grid = (M // tm, N // tn, K // tk)
    return pl.pallas_call(
        _matmul_resid_kernel,
        out_shape=jax.ShapeDtypeStruct((M, N), out_dtype),
        grid=grid,
        in_specs=[
            pl.BlockSpec((tm, tk), lambda i, j, k: (i, k)),
            pl.BlockSpec((tk, tn), lambda i, j, k: (k, j)),
            pl.BlockSpec((1, tn), lambda i, j, k: (0, j)),
            pl.BlockSpec((tm, tn), lambda i, j, k: (i, j)),
        ],
        out_specs=pl.BlockSpec((tm, tn), lambda i, j, k: (i, j)),
        scratch_shapes=[pltpu.VMEM((tm, tn), jnp.float32)],
        compiler_params=_cparams(("parallel", "parallel", "arbitrary")),
    )(a2d, w, bias.reshape(1, N), res2d)


def flash_attention(qkv, n_head):
    # qkv: (B, T, 3C) bf16 -> (B, T, C) bf16, causal self-attention.
    B, T, C3 = qkv.shape
    C = C3 // 3
    hd = C // n_head
    t = _pick_tile(T, 256, 8)                       # tq == tk (needed for block skipping)
    grid = (B, T // t, T // t)
    return pl.pallas_call(
        functools.partial(_flash_attn_kernel, n_head=n_head, head_dim=hd,
                          scale=1.0 / math.sqrt(hd)),
        out_shape=jax.ShapeDtypeStruct((B, T, C), qkv.dtype),
        grid=grid,
        in_specs=[
            pl.BlockSpec((1, t, C3), lambda b, qi, ki: (b, qi, 0)),   # q rows
            pl.BlockSpec((1, t, C3), lambda b, qi, ki: (b, ki, 0)),   # k/v rows
        ],
        out_specs=pl.BlockSpec((1, t, C), lambda b, qi, ki: (b, qi, 0)),
        scratch_shapes=[
            pltpu.VMEM((n_head, t, 1), jnp.float32),   # m
            pltpu.VMEM((n_head, t, 1), jnp.float32),   # l
            pltpu.VMEM((t, C), jnp.float32),           # acc (all heads, lane-dense)
        ],
        compiler_params=_cparams(("parallel", "parallel", "arbitrary")),
    )(qkv, qkv)


# ----------------------------- Model (forward) -----------------------------


def init_params(key, *, n_layer, n_embd, vocab):
    def normal(k, shape):
        return (0.02 * jax.random.normal(k, shape)).astype(jnp.float32)

    keys = jax.random.split(key, n_layer + 1)
    blocks = []
    for l in range(n_layer):
        bk = jax.random.split(keys[l], 8)
        blocks.append(dict(
            ln1_g=jnp.ones((n_embd,), jnp.float32),
            ln1_b=jnp.zeros((n_embd,), jnp.float32),
            attn_w=normal(bk[0], (n_embd, 3 * n_embd)),
            attn_b=jnp.zeros((3 * n_embd,), jnp.float32),
            proj_w=normal(bk[1], (n_embd, n_embd)),
            proj_b=jnp.zeros((n_embd,), jnp.float32),
            ln2_g=jnp.ones((n_embd,), jnp.float32),
            ln2_b=jnp.zeros((n_embd,), jnp.float32),
            fc_w=normal(bk[2], (n_embd, 4 * n_embd)),
            fc_b=jnp.zeros((4 * n_embd,), jnp.float32),
            mproj_w=normal(bk[3], (4 * n_embd, n_embd)),
            mproj_b=jnp.zeros((n_embd,), jnp.float32),
        ))
    params = dict(
        blocks=blocks,
        lnf_g=jnp.ones((n_embd,), jnp.float32),
        lnf_b=jnp.zeros((n_embd,), jnp.float32),
        lm_head_w=normal(keys[-1], (n_embd, vocab)),   # lm_head has no bias
    )
    return params


def new_gpt_forward(X, params, n_head):
    # X: (B, T, C) embeddings fed directly into transformer.h (matches NewGPT.forward).
    B, T, C = X.shape
    M = B * T
    bf16 = jnp.bfloat16

    x = X.reshape(M, C).astype(bf16)                 # residual stream (M, C) bf16
    for blk in params["blocks"]:
        aw, pw = blk["attn_w"].astype(bf16), blk["proj_w"].astype(bf16)
        fw, mw = blk["fc_w"].astype(bf16), blk["mproj_w"].astype(bf16)

        # ---- self-attention sublayer: x = x + proj(attn(ln_1(x))) ----
        qkv = ln_matmul(x, blk["ln1_g"], blk["ln1_b"], aw, blk["attn_b"])   # (M, 3C)
        a = flash_attention(qkv.reshape(B, T, 3 * C), n_head)              # (B, T, C)
        x = matmul_bias_residual(a.reshape(M, C), pw, blk["proj_b"], x)     # + residual
        # TODO(synk): attn/resid dropout omitted (p=0 / eval mode => identity).

        # ---- MLP sublayer: x = x + mproj(gelu(fc(ln_2(x)))) ----
        h = ln_matmul(x, blk["ln2_g"], blk["ln2_b"], fw, blk["fc_b"],
                      activation="gelu")                                    # (M, 4C)
        x = matmul_bias_residual(h, mw, blk["mproj_b"], x)                  # + residual

    # ---- final LayerNorm + lm_head (no bias), fused ----
    logits = ln_matmul(x, params["lnf_g"], params["lnf_b"],
                       params["lm_head_w"].astype(bf16),
                       bias=None, out_dtype=jnp.float32)
    vocab = params["lm_head_w"].shape[1]
    return logits.reshape(B, T, vocab)


# ----------------------------- pure-JAX reference -----------------------------


def _ref_forward(X, params, n_head):
    def ln(x, g, b):
        m = jnp.mean(x, axis=-1, keepdims=True)
        v = jnp.mean((x - m) ** 2, axis=-1, keepdims=True)
        return (x - m) * jax.lax.rsqrt(v + 1e-5) * g + b

    def gelu(y):
        return 0.5 * y * (1.0 + jnp.tanh(0.7978845608028654 * (y + 0.044715 * y ** 3)))

    B, T, C = X.shape
    hd = C // n_head
    x = X.astype(jnp.float32)
    for blk in params["blocks"]:
        h = ln(x, blk["ln1_g"], blk["ln1_b"])
        qkv = h @ blk["attn_w"] + blk["attn_b"]
        q, k, v = jnp.split(qkv, 3, axis=-1)
        q = q.reshape(B, T, n_head, hd).transpose(0, 2, 1, 3)
        k = k.reshape(B, T, n_head, hd).transpose(0, 2, 1, 3)
        v = v.reshape(B, T, n_head, hd).transpose(0, 2, 1, 3)
        s = jnp.einsum("bhqd,bhkd->bhqk", q, k) / math.sqrt(hd)
        mask = jnp.tril(jnp.ones((T, T), bool))
        s = jnp.where(mask, s, -1e30)
        p = jax.nn.softmax(s, axis=-1)
        a = jnp.einsum("bhqk,bhkd->bhqd", p, v).transpose(0, 2, 1, 3).reshape(B, T, C)
        x = x + (a @ blk["proj_w"] + blk["proj_b"])
        h = ln(x, blk["ln2_g"], blk["ln2_b"])
        h = gelu(h @ blk["fc_w"] + blk["fc_b"])
        x = x + (h @ blk["mproj_w"] + blk["mproj_b"])
    x = ln(x, params["lnf_g"], params["lnf_b"])
    return x @ params["lm_head_w"]


# ----------------------------- main -----------------------------

if __name__ == "__main__":
    B, T, C = 2, 8, 32
    n_head, n_layer, vocab = 4, 2, 64

    key = jax.random.PRNGKey(0)
    kx, kp = jax.random.split(key)
    X = jax.random.normal(kx, (B, T, C), dtype=jnp.float32)
    params = init_params(kp, n_layer=n_layer, n_embd=C, vocab=vocab)

    out = jax.block_until_ready(new_gpt_forward(X, params, n_head))

    ref = _ref_forward(X, params, n_head)
    assert out.shape == (B, T, vocab)
    max_err = float(jnp.max(jnp.abs(out - ref)))
    # bf16 activations/weights with f32 accumulation -> compare at loose tolerance.
    assert jnp.allclose(out, ref, atol=3e-2, rtol=3e-2), max_err

    print("KERNEL_OK")
</pallas_src>

<mosaic_0001>
module attributes {stable_mosaic.version = 11 : i64} {
  func.func @_ln_matmul_kernel(%arg0: i32, %arg1: i32, %arg2: memref<16x32xbf16, #tpu.memory_space<vmem>>, %arg3: memref<1x32xf32, #tpu.memory_space<vmem>>, %arg4: memref<1x32xf32, #tpu.memory_space<vmem>>, %arg5: memref<32x96xbf16, #tpu.memory_space<vmem>>, %arg6: memref<1x96xf32, #tpu.memory_space<vmem>>, %arg7: memref<16x96xbf16, #tpu.memory_space<vmem>>, %arg8: memref<16x32xbf16, #tpu.memory_space<vmem>>) attributes {dimension_semantics = [#tpu.dimension_semantics<parallel>, #tpu.dimension_semantics<arbitrary>], iteration_bounds = array<i64: 1, 1>, scalar_prefetch = 0 : i64, scratch_operands = 1 : i64, tpu.core_type = #tpu.core_type<tc>, window_params = [{transform_indices = @transform_0, window_bounds = array<i64: 16, 32>}, {pipeline_mode = #tpu.pipeline_mode<synchronous>, transform_indices = @transform_1, window_bounds = array<i64: 1, 32>}, {pipeline_mode = #tpu.pipeline_mode<synchronous>, transform_indices = @transform_2, window_bounds = array<i64: 1, 32>}, {transform_indices = @transform_3, window_bounds = array<i64: 32, 96>}, {transform_indices = @transform_4, window_bounds = array<i64: 1, 96>}, {transform_indices = @transform_5, window_bounds = array<i64: 16, 96>}]} {
    %c0_i32 = arith.constant 0 : i32
    %0 = arith.cmpi eq, %arg1, %c0_i32 : i32
    %1 = arith.extui %0 : i1 to i32
    %c0_i32_0 = arith.constant 0 : i32
    %2 = arith.cmpi ne, %1, %c0_i32_0 : i32
    scf.if %2 {
      %c0_8 = arith.constant 0 : index
      %c0_9 = arith.constant 0 : index
      %11 = vector.load %arg2[%c0_8, %c0_9] : memref<16x32xbf16, #tpu.memory_space<vmem>>, vector<16x32xbf16>
      %12 = arith.extf %11 : vector<16x32xbf16> to vector<16x32xf32>
      %cst_10 = arith.constant dense<0.000000e+00> : vector<16xf32>
      %13 = vector.multi_reduction <add>, %12, %cst_10 [1] : vector<16x32xf32> to vector<16xf32>
      %14 = vector.shape_cast %13 : vector<16xf32> to vector<16x1xf32>
      %cst_11 = arith.constant 3.200000e+01 : f32
      %15 = vector.broadcast %cst_11 : f32 to vector<16x1xf32>
      %16 = arith.divf %14, %15 : vector<16x1xf32>
      %17 = vector.broadcast %16 : vector<16x1xf32> to vector<16x32xf32>
      %18 = arith.subf %12, %17 : vector<16x32xf32>
      %19 = arith.mulf %18, %18 : vector<16x32xf32>
      %cst_12 = arith.constant dense<0.000000e+00> : vector<16xf32>
      %20 = vector.multi_reduction <add>, %19, %cst_12 [1] : vector<16x32xf32> to vector<16xf32>
      %21 = vector.shape_cast %20 : vector<16xf32> to vector<16x1xf32>
      %cst_13 = arith.constant 3.200000e+01 : f32
      %22 = vector.broadcast %cst_13 : f32 to vector<16x1xf32>
      %23 = arith.divf %21, %22 : vector<16x1xf32>
      %24 = vector.broadcast %16 : vector<16x1xf32> to vector<16x32xf32>
      %25 = arith.subf %12, %24 : vector<16x32xf32>
      %cst_14 = arith.constant 9.99999974E-6 : f32
      %26 = vector.broadcast %cst_14 : f32 to vector<16x1xf32>
      %27 = arith.addf %23, %26 : vector<16x1xf32>
      %28 = math.rsqrt %27 : vector<16x1xf32>
      %29 = vector.broadcast %28 : vector<16x1xf32> to vector<16x32xf32>
      %30 = arith.mulf %25, %29 : vector<16x32xf32>
      %c0_15 = arith.constant 0 : index
      %c0_16 = arith.constant 0 : index
      %31 = vector.load %arg3[%c0_15, %c0_16] : memref<1x32xf32, #tpu.memory_space<vmem>>, vector<1x32xf32>
      %32 = vector.broadcast %31 : vector<1x32xf32> to vector<16x32xf32>
      %33 = arith.mulf %30, %32 : vector<16x32xf32>
      %c0_17 = arith.constant 0 : index
      %c0_18 = arith.constant 0 : index
      %34 = vector.load %arg4[%c0_17, %c0_18] : memref<1x32xf32, #tpu.memory_space<vmem>>, vector<1x32xf32>
      %35 = vector.broadcast %34 : vector<1x32xf32> to vector<16x32xf32>
      %36 = arith.addf %33, %35 : vector<16x32xf32>
      %37 = arith.truncf %36 : vector<16x32xf32> to vector<16x32xbf16>
      %c0_19 = arith.constant 0 : index
      %c0_20 = arith.constant 0 : index
      %38 = vector.load %arg8[%c0_19, %c0_20] : memref<16x32xbf16, #tpu.memory_space<vmem>>, vector<16x32xbf16>
      tpu.vector_store %arg8[%c0_19, %c0_20], %37 {strides = array<i32>} : memref<16x32xbf16, #tpu.memory_space<vmem>>, vector<16x32xbf16>,
    } else {
    }
    %c0 = arith.constant 0 : index
    %c0_1 = arith.constant 0 : index
    %3 = vector.load %arg8[%c0, %c0_1] : memref<16x32xbf16, #tpu.memory_space<vmem>>, vector<16x32xbf16>
    %c0_2 = arith.constant 0 : index
    %c0_3 = arith.constant 0 : index
    %4 = vector.load %arg5[%c0_2, %c0_3] : memref<32x96xbf16, #tpu.memory_space<vmem>>, vector<32x96xbf16>
    %cst = arith.constant dense<0.000000e+00> : vector<16x96xf32>
    %5 = tpu.matmul %3, %4, %cst {dimension_numbers = #tpu.dot_dimension_numbers<[1], [0], [0], [1], [0, 0, 1, 1], [], []>} : vector<16x32xbf16>, vector<32x96xbf16>, vector<16x96xf32> -> vector<16x96xf32>
    %c0_4 = arith.constant 0 : index
    %c0_5 = arith.constant 0 : index
    %6 = vector.load %arg6[%c0_4, %c0_5] : memref<1x96xf32, #tpu.memory_space<vmem>>, vector<1x96xf32>
    %7 = vector.broadcast %6 : vector<1x96xf32> to vector<16x96xf32>
    %8 = arith.addf %5, %7 : vector<16x96xf32>
    %9 = arith.truncf %8 : vector<16x96xf32> to vector<16x96xbf16>
    %c0_6 = arith.constant 0 : index
    %c0_7 = arith.constant 0 : index
    %10 = vector.load %arg7[%c0_6, %c0_7] : memref<16x96xbf16, #tpu.memory_space<vmem>>, vector<16x96xbf16>
    tpu.vector_store %arg7[%c0_6, %c0_7], %9 {strides = array<i32>} : memref<16x96xbf16, #tpu.memory_space<vmem>>, vector<16x96xbf16>,
    return
  }
  func.func @transform_0(%arg0: i32, %arg1: i32) -> (i32, i32) {
    %c0_i32 = arith.constant 0 : i32
    %c0_i32_0 = arith.constant 0 : i32
    return %arg0, %c0_i32 : i32, i32
  }
  func.func @transform_1(%arg0: i32, %arg1: i32) -> (i32, i32) {
    %c0_i32 = arith.constant 0 : i32
    %c0_i32_0 = arith.constant 0 : i32
    %c0_i32_1 = arith.constant 0 : i32
    return %c0_i32, %c0_i32_0 : i32, i32
  }
  func.func @transform_2(%arg0: i32, %arg1: i32) -> (i32, i32) {
    %c0_i32 = arith.constant 0 : i32
    %c0_i32_0 = arith.constant 0 : i32
    %c0_i32_1 = arith.constant 0 : i32
    return %c0_i32, %c0_i32_0 : i32, i32
  }
  func.func @transform_3(%arg0: i32, %arg1: i32) -> (i32, i32) {
    %c0_i32 = arith.constant 0 : i32
    %c0_i32_0 = arith.constant 0 : i32
    return %c0_i32, %arg1 : i32, i32
  }
  func.func @transform_4(%arg0: i32, %arg1: i32) -> (i32, i32) {
    %c0_i32 = arith.constant 0 : i32
    %c0_i32_0 = arith.constant 0 : i32
    return %c0_i32, %arg1 : i32, i32
  }
  func.func @transform_5(%arg0: i32, %arg1: i32) -> (i32, i32) {
    %c0_i32 = arith.constant 0 : i32
    return %arg0, %arg1 : i32, i32
  }
}

</mosaic_0001>

<llo_original>
// kernel: tpu_custom_call.1
$region0: #{tpu_custom_call.1}
  #allocation0 [shape = 'u32[]', space=smem, size = 0x4, offset = 0x4, fixed_abs, tag = 'smem constant byte address 0x4 - core index']
  #allocation1 [shape = 'u32[72,128]{1,0:T(1,128)}', space=vmem, size = 0x9000, scoped, tag = 'internal scratch']
  #allocation2 [shape = 'bf16[16,32]{1,0:T(8,128)(2,1)}', space=vmem, size = 0x1000, scoped, tag = 'scratch operand']
  %s0 = inlined_call_operand.hbm [shape: bf16[16,32], index: 0, kind: input, shape index: {}]
  %s1 = inlined_call_operand.hbm [shape: f32[1,32], index: 1, kind: input, shape index: {}]
  %s2 = inlined_call_operand.vmem [shape: f32[1,32], index: 2, kind: input, shape index: {}]
  %s3 = inlined_call_operand.hbm [shape: bf16[32,96], index: 3, kind: input, shape index: {}]
  %s4 = inlined_call_operand.vmem [shape: f32[1,96], index: 4, kind: input, shape index: {}]
  %s5 = inlined_call_operand.hbm [shape: bf16[16,96], index: 5, kind: output, shape index: {}]
  %s6 = sld [smem:[#allocation0]]
  $region46: #{tpu_custom_call.1} parent=0
    _
  %s8 = ssub.s32 1, %s6
  %s9 = scalar_select 0, %s8, %s6
  $region1: #{tpu_custom_call.1} parent=0
    #allocation3 [shape = 'u8[4096]{0}', space=vmem, size = 0x1000, scoped, tag = 'input window, operand 0, single buffered']
    #allocation4 [shape = 's32[1]{0}', space=sflag, size = 0x4, scoped, tag = 'scoped memory for tpu_custom_call.1']
    #allocation5 [shape = 's32[1]{0}', space=sflag, size = 0x4, scoped, tag = 'scoped memory for tpu_custom_call.1']
    #allocation6 [shape = 'u8[512]{0}', space=vmem, size = 0x400, scoped, tag = 'input window, operand 1, single buffered']
    #allocation7 [shape = 's32[1]{0}', space=sflag, size = 0x4, scoped, tag = 'scoped memory for tpu_custom_call.1']
    #allocation8 [shape = 'u8[8192]{0}', space=vmem, size = 0x2000, scoped, tag = 'input window, operand 3, single buffered']
    #allocation9 [shape = 'u8[4096]{0}', space=vmem, size = 0x1000, scoped, tag = 'output window, operand 0, single buffered']
    %10 = vsyncpa [#allocation4], 0
    %11 = vsyncpa [#allocation7], 0
    %12 = vsyncpa [#allocation5], 0
    // Predicated region
    $region2: #{tpu_custom_call.1} parent=1 // pred_check
      _
    $region3: #{tpu_custom_call.1} parent=1 // pred_check_branch
      %14 = sbr.rel (0) target = $region5
    $region4: #{tpu_custom_call.1} parent=1 // pred_region
      %16 = vsyncadd [#allocation4], 0
      %s17 = sshll.u32 %s0, 4
      %s18 = int_to_ptr.hbm [resolvable:$true] %s17
      %s19 = sshll.u32 [#allocation3], 4
      %s20 = int_to_ptr.vmem [resolvable:$true] %s19
      %25 = dma.hbm_to_vmem [thread:$0]  %s18, 128, %s20, [#allocation4], 64, 64, 4
    $region5: #{tpu_custom_call.1} parent=1 // pred_fallthru
      _
    // Predicated region
    $region6: #{tpu_custom_call.1} parent=1 // pred_check
      _
    $region7: #{tpu_custom_call.1} parent=1 // pred_check_branch
      %27 = sbr.rel (0) target = $region9
    $region8: #{tpu_custom_call.1} parent=1 // pred_region
      %29 = vsyncadd [#allocation7], 0
      %s31 = sshll.u32 %s1, 4
      %s32 = int_to_ptr.hbm [resolvable:$true] %s31
      %s33 = sshll.u32 [#allocation6], 4
      %s34 = int_to_ptr.vmem [resolvable:$true] %s33
      %36 = dma.hbm_to_vmem [thread:$0]  %s32, 16, %s34, [#allocation7]
    $region9: #{tpu_custom_call.1} parent=1 // pred_fallthru
      _
    // Predicated region
    $region10: #{tpu_custom_call.1} parent=1 // pred_check
      _
    $region11: #{tpu_custom_call.1} parent=1 // pred_check_branch
      %38 = sbr.rel (0) target = $region13
    $region12: #{tpu_custom_call.1} parent=1 // pred_region
      _
    $region13: #{tpu_custom_call.1} parent=1 // pred_fallthru
      _
    // Predicated region
    $region14: #{tpu_custom_call.1} parent=1 // pred_check
      _
    $region15: #{tpu_custom_call.1} parent=1 // pred_check_branch
      %40 = sbr.rel (0) target = $region17
    $region16: #{tpu_custom_call.1} parent=1 // pred_region
      %42 = vsyncadd [#allocation7], 0
      %s43 = sshll.u32 %s3, 4
      %s44 = int_to_ptr.hbm [resolvable:$true] %s43
      %s45 = sshll.u32 [#allocation8], 4
      %s46 = int_to_ptr.vmem [resolvable:$true] %s45
      %51 = dma.hbm_to_vmem [thread:$0]  %s44, 256, %s46, [#allocation7], 64, 64, 4
    $region17: #{tpu_custom_call.1} parent=1 // pred_fallthru
      _
    // Predicated region
    $region18: #{tpu_custom_call.1} parent=1 // pred_check
      _
    $region19: #{tpu_custom_call.1} parent=1 // pred_check_branch
      %53 = sbr.rel (0) target = $region21
    $region20: #{tpu_custom_call.1} parent=1 // pred_region
      _
    $region21: #{tpu_custom_call.1} parent=1 // pred_fallthru
      _
    // Predicated region
    $region22: #{tpu_custom_call.1} parent=1 // pred_check
      _
    $region23: #{tpu_custom_call.1} parent=1 // pred_check_branch
      %55 = sbr.rel (0) target = $region25
    $region24: #{tpu_custom_call.1} parent=1 // pred_region
      %57 = dma.done [#allocation4], 128
    $region25: #{tpu_custom_call.1} parent=1 // pred_fallthru
      _
    // Predicated region
    $region26: #{tpu_custom_call.1} parent=1 // pred_check
      _
    $region27: #{tpu_custom_call.1} parent=1 // pred_check_branch
      %59 = sbr.rel (0) target = $region29
    $region28: #{tpu_custom_call.1} parent=1 // pred_region
      %61 = dma.done [#allocation7], 16
    $region29: #{tpu_custom_call.1} parent=1 // pred_fallthru
      _
    // Predicated region
    $region30: #{tpu_custom_call.1} parent=1 // pred_check
      _
    $region31: #{tpu_custom_call.1} parent=1 // pred_check_branch
      %63 = sbr.rel (0) target = $region33
    $region32: #{tpu_custom_call.1} parent=1 // pred_region
      %65 = dma.done [#allocation7], 256
    $region33: #{tpu_custom_call.1} parent=1 // pred_fallthru
      _
    %p67 = scmp.eq.s32.totalorder 0, 0
    // Predicated region
    $region34: #{tpu_custom_call.1} parent=1 // pred_check
      %p68 = pneg %p67
    $region35: #{tpu_custom_call.1} parent=1 // pred_check_branch
      %70 = sbr.rel (%p68) target = $region37
    $region36: #{tpu_custom_call.1} parent=1 // pred_region
      %v71 = vld [vmem:[#allocation3] sm:$0xf]
      %v72 = vld [vmem:[#allocation3 + $0x4] sm:$0xf]
      %v73 = vunpack.c.l.bf16 %v71
      %v74 = vunpack.c.l.bf16 %v72
      %vm75 = vcmask 261120
      %v76 = vsel %vm75, %v73, 0.0
      %77 = vadd.xlane.f32.xlu0 %v76
      %v78 = vpop.xlane.xlu0 %77
      %v79 = vsel %vm75, %v74, 0.0
      %80 = vadd.xlane.f32.xlu0 %v79
      %v81 = vpop.xlane.xlu0 %80
      %v82 = vrcp.pop 32.0
      %v83 = vmul.f32 32.0, %v82
      %v84 = vsub.f32 1.0, %v83
      %v85 = vmul.f32 %v82, %v84
      %v86 = vadd.f32 %v82, %v85
      %vm87 = vweird.f32 %v82
      %v88 = vsel %vm87, %v82, %v86
      %v89 = vmul.f32 %v78, %v88
      %v90 = vmul.f32 %v81, %v88
      %v91 = vsub.f32 %v73, %v89
      %v92 = vsub.f32 %v74, %v90
      %v93 = vmul.f32 %v91, %v91
      %v94 = vmul.f32 %v92, %v92
      %v95 = vsel %vm75, %v93, 0.0
      %96 = vadd.xlane.f32.xlu0 %v95
      %v97 = vpop.xlane.xlu0 %96
      %v98 = vsel %vm75, %v94, 0.0
      %99 = vadd.xlane.f32.xlu0 %v98
      %v100 = vpop.xlane.xlu0 %99
      %v101 = vmul.f32 %v97, %v88
      %v102 = vmul.f32 %v100, %v88
      %v103 = vadd.f32 %v101, 1e-05
      %v104 = vadd.f32 %v102, 1e-05
      %v105 = vrsqrt.pop %v103
      %v106 = vmul.f32 %v105, %v103
      %v107 = vmul.f32 %v106, %v105
      %v108 = vmul.f32 0.5, %v107
      %v109 = vsub.f32 1.5, %v108
      %v110 = vmul.f32 %v105, %v109
      %vm111 = vweird.f32 %v103
      %vm112 = vweird.f32 %v105
      %vm113 = vmor %vm111, %vm112
      %v114 = vsel %vm113, %v105, %v110
      %v115 = vrsqrt.pop %v104
      %v116 = vmul.f32 %v115, %v104
      %v117 = vmul.f32 %v116, %v115
      %v118 = vmul.f32 0.5, %v117
      %v119 = vsub.f32 1.5, %v118
      %v120 = vmul.f32 %v115, %v119
      %vm121 = vweird.f32 %v104
      %vm122 = vweird.f32 %v115
      %vm123 = vmor %vm121, %vm122
      %v124 = vsel %vm123, %v115, %v120
      %v125 = vmul.f32 %v91, %v114
      %v126 = vmul.f32 %v92, %v124
      %v127 = vld [vmem:[#allocation6] sm:$0x1]
      %v129 = vperm.slane %v127, 0
      %v131 = vmul.f32 %v125, %v129
      %v132 = vmul.f32 %v126, %v129
      %v133 = vld [vmem:[%s2] sm:$0x1]
      %v135 = vperm.slane %v133, 0
      %v137 = vadd.f32 %v131, %v135
      %v138 = vadd.f32 %v132, %v135
      %v139 = vpack.c.bf16 %v137, %v137
      %v140 = vpack.c.bf16 %v138, %v138
      %vm141 = vcmask 257024
      %142 = vst.msk [vmem:[#allocation2] sm:$0xf] %vm141, %v139
      %143 = vst.msk [vmem:[#allocation2 + $0x4] sm:$0xf] %vm141, %v140
    $region37: #{tpu_custom_call.1} parent=1 // pred_fallthru
      _
    %v144 = vld [vmem:[#allocation2] sm:$0xf]
    %v145 = vld [vmem:[#allocation2 + $0x4] sm:$0xf]
    %v146 = vld [vmem:[#allocation8] sm:$0xf]
    %v147 = vld [vmem:[#allocation8 + $0x4] sm:$0xf]
    %v148 = vld [vmem:[#allocation8 + $0x8] sm:$0xf]
    %v149 = vld [vmem:[#allocation8 + $0xc] sm:$0xf]
    %v150 = vld [vmem:[%s4] sm:$0x1]
    %v152 = vperm.slane %v150, 0
    %v156 = vunpack.c.l.b16 %v144
    %v157 = vunpack.c.l.b16 %v145
    %v158 = vpack.c.b16 %v157, %v156
    %v163 = vunpack.c.l.b16 %v146
    %v164 = vunpack.c.l.b16 %v147
    %v165 = vunpack.c.l.b16 %v148
    %v166 = vunpack.c.l.b16 %v149
    %v167 = vpack.c.b16 %v164, %v163
    %v168 = vpack.c.b16 %v166, %v165
    %vm171 = vcmask 261120
    %v173 = vsel %vm171, %v158, 0
    %175 = vmatpush.bf16.msra.mxu0 0
    %176 = vmatpush.bf16.msra.mxu0 0
    %177 = vmatpush.bf16.msra.mxu0 0
    %178 = vmatpush.bf16.msra.mxu0 0
    %179 = vmatpush.bf16.msra.mxu0 0
    %180 = vmatpush.bf16.msra.mxu0 0
    %181 = vmatpush.bf16.msra.mxu0 %v168
    %182 = vmatpush.bf16.msra.mxu0 %v167
    %183 = vmatmul.bf16.gmra.mxu0 %v173
    %v184 = vpop.f32.mrf.mxu0
    %v185 = vadd.f32 %v152, %v184
    %v186 = vpop.f32.mrf.mxu0
    %v187 = vadd.f32 %v152, %v186
    %188 = vdwg.mxu0
    %v189 = vpack.c.bf16 %v185, %v185
    %v190 = vpack.c.bf16 %v187, %v187
    %vm191 = vcmask 781312
    %192 = vst.msk [vmem:[#allocation9] sm:$0xf] %vm191, %v189
    %193 = vst.msk [vmem:[#allocation9 + $0x4] sm:$0xf] %vm191, %v190
    // Predicated region
    $region38: #{tpu_custom_call.1} parent=1 // pred_check
      _
    $region39: #{tpu_custom_call.1} parent=1 // pred_check_branch
      %195 = sbr.rel (0) target = $region41
    $region40: #{tpu_custom_call.1} parent=1 // pred_region
      %197 = vsyncadd [#allocation5], 0
      %s198 = sshll.u32 [#allocation9], 4
      %s199 = int_to_ptr.vmem [resolvable:$true] %s198
      %s200 = sshll.u32 %s5, 4
      %s201 = int_to_ptr.hbm [resolvable:$true] %s200
      %206 = dma.vmem_to_hbm [thread:$0]  %s199, 128, %s201, [#allocation5], 64, 64, 4
    $region41: #{tpu_custom_call.1} parent=1 // pred_fallthru
      _
    // Predicated region
    $region42: #{tpu_custom_call.1} parent=1 // pred_check
      _
    $region43: #{tpu_custom_call.1} parent=1 // pred_check_branch
      %208 = sbr.rel (0) target = $region45
    $region44: #{tpu_custom_call.1} parent=1 // pred_region
      %210 = dma.done [#allocation5], 128
    $region45: #{tpu_custom_call.1} parent=1 // pred_fallthru
      _
    %211 = vsyncpa [#allocation4], 1
    %212 = vsyncpa [#allocation7], 1
    %213 = vsyncpa [#allocation5], 1

</llo_original>
